<compile_context>
chip_gen: v5e
topology: v5e:2x2
jax: 0.10.0
libtpu: 0.0.40
codegen_flags: <defaults>
</compile_context>

<pallas_src>
import math

import jax
import jax.numpy as jnp
from jax.experimental import pallas as pl
from jax.experimental.pallas import tpu as pltpu


_LANES = 128
_TILE_ROWS_MAX = 4096            # 4096 x 128 bf16 = 1 MiB per stream buffer
_NEUTRAL_LOGIT = -1e9            # BCEWithLogits(-1e9, 0) == 0 exactly in f32


def _ceil_div(a, b):
    return -(-a // b)


def _bce_logits(x, z):
    """Numerically-stable BCEWithLogits (pos_weight = 1)."""
    return jnp.maximum(x, 0.0) - x * z + jnp.log(1.0 + jnp.exp(-jnp.abs(x)))


# -----------------------------------------------------------------------------
# Pallas kernel: fused objectness-softplus + class-BCE weighted reductions
# -----------------------------------------------------------------------------
def _make_fused_kernel(tile_rows, row_segments):
    """row_segments: static tuple of (start_row, stop_row, weight) per head."""

    def kernel(obj_ref, xc_ref, zc_ref, wc_ref, out_ref):
        t = pl.program_id(0)

        # ---- dense objectness stream: target is 0, so BCE(x,0) == softplus(x)
        x = obj_ref[...].astype(jnp.float32)                       # (tile, 128)
        softplus = jnp.maximum(x, 0.0) + jnp.log(1.0 + jnp.exp(-jnp.abs(x)))
        # Per-row weight balance[h]/n_h rebuilt from static segment bounds
        # (3 compare+selects on a (tile, 1) column; no weight stream needed).
        row = t * tile_rows + jax.lax.broadcasted_iota(
            jnp.int32, (tile_rows, 1), 0)
        w = jnp.zeros((tile_rows, 1), jnp.float32)
        for start, stop, weight in row_segments:
            w = jnp.where((row >= start) & (row < stop), jnp.float32(weight), w)
        # Reduce to an (8,128) partial with vreg-wise adds only.
        obj_part = jnp.sum((w * softplus).reshape(tile_rows // 8, 8, _LANES),
                           axis=0)

        # ---- tiny class stream: full block each step, credited to step 0 only
        xc = xc_ref[...].astype(jnp.float32)
        zc = zc_ref[...].astype(jnp.float32)
        wc = wc_ref[...]
        bce = jnp.maximum(xc, 0.0) - xc * zc + jnp.log(1.0 + jnp.exp(-jnp.abs(xc)))
        cls_part = jnp.sum((wc * bce).reshape(-1, 8, _LANES), axis=0)
        cls_part = cls_part * (t == 0).astype(jnp.float32)

        out_ref[0, 0, :, :] = obj_part
        out_ref[0, 1, :, :] = cls_part

    return kernel


def fused_obj_cls_bce(obj_segments, cls_segments,
                      tile_rows_max=_TILE_ROWS_MAX):
    """Single pallas_call computing
         obj_sum = sum_h w_h * sum_i softplus(obj_logits_h[i])
         cls_sum = sum_h sum_i w_cls_h[i] * BCEWithLogits(x_h[i], z_h[i])

    obj_segments: list of (logits_1d bf16, weight python float)
    cls_segments: list of (logits_1d bf16, targets_1d bf16, weights_1d f32)
    """
    # ------------- dense objectness stream (bf16, implicit zero target) -----
    parts, row_segments = [], []
    row = 0
    for x, w in obj_segments:
        n = x.shape[0]
        rows_h = _ceil_div(n, _LANES)
        parts.append(x)
        pad = rows_h * _LANES - n
        if pad:
            parts.append(jnp.full((pad,), _NEUTRAL_LOGIT, jnp.bfloat16))
        row_segments.append((row, row + rows_h, float(w)))
        row += rows_h
    total_rows = row
    n_tiles = max(1, _ceil_div(total_rows, tile_rows_max))
    tile_rows = _ceil_div(_ceil_div(total_rows, n_tiles), 16) * 16  # bf16 tile
    padded_rows = n_tiles * tile_rows
    if padded_rows > total_rows:
        parts.append(jnp.full(((padded_rows - total_rows) * _LANES,),
                              _NEUTRAL_LOGIT, jnp.bfloat16))
    obj2d = jnp.concatenate(parts).reshape(padded_rows, _LANES)

    # ------------- tiny class stream (bf16 x/z, f32 per-element weight) -----
    xc = jnp.concatenate([s[0] for s in cls_segments])
    zc = jnp.concatenate([s[1] for s in cls_segments])
    wc = jnp.concatenate([s[2] for s in cls_segments])
    n_cls = xc.shape[0]
    cls_rows = max(16, _ceil_div(_ceil_div(n_cls, _LANES), 16) * 16)
    pad = cls_rows * _LANES - n_cls
    if pad:
        xc = jnp.concatenate([xc, jnp.full((pad,), _NEUTRAL_LOGIT, jnp.bfloat16)])
        zc = jnp.concatenate([zc, jnp.zeros((pad,), jnp.bfloat16)])
        wc = jnp.concatenate([wc, jnp.zeros((pad,), jnp.float32)])
    xc2d = xc.reshape(cls_rows, _LANES)
    zc2d = zc.reshape(cls_rows, _LANES)
    wc2d = wc.reshape(cls_rows, _LANES)

    n_obj_e = padded_rows * _LANES
    n_cls_e = cls_rows * _LANES
    cost = pl.CostEstimate(
        flops=int(10 * (n_obj_e + n_cls_e)),
        transcendentals=int(2 * (n_obj_e + n_cls_e)),
        bytes_accessed=int(2 * n_obj_e + 8 * n_cls_e
                           + n_tiles * 2 * 8 * _LANES * 4))

    out = pl.pallas_call(
        _make_fused_kernel(tile_rows, tuple(row_segments)),
        out_shape=jax.ShapeDtypeStruct((n_tiles, 2, 8, _LANES), jnp.float32),
        grid=(n_tiles,),
        in_specs=[
            pl.BlockSpec((tile_rows, _LANES), lambda t: (t, 0)),
            pl.BlockSpec((cls_rows, _LANES), lambda t: (0, 0)),
            pl.BlockSpec((cls_rows, _LANES), lambda t: (0, 0)),
            pl.BlockSpec((cls_rows, _LANES), lambda t: (0, 0)),
        ],
        out_specs=pl.BlockSpec((1, 2, 8, _LANES), lambda t: (t, 0, 0, 0)),
        compiler_params=pltpu.CompilerParams(
            dimension_semantics=("parallel",),
            vmem_limit_bytes=32 * 1024 * 1024),
        cost_estimate=cost,
    )(obj2d, xc2d, zc2d, wc2d)

    obj_sum = jnp.sum(out[:, 0])
    cls_sum = jnp.sum(out[:, 1])
    return obj_sum, cls_sum


def obj_cls_bce_reference(obj_segments, cls_segments):
    """Plain-JAX mirror of fused_obj_cls_bce (identical math, for self-check)."""
    obj_sum = jnp.float32(0.0)
    for x, w in obj_segments:
        xf = x.astype(jnp.float32)
        obj_sum = obj_sum + jnp.float32(w) * jnp.sum(
            jnp.maximum(xf, 0.0) + jnp.log(1.0 + jnp.exp(-jnp.abs(xf))))
    cls_sum = jnp.float32(0.0)
    for x, z, w in cls_segments:
        xf = x.astype(jnp.float32)
        zf = z.astype(jnp.float32)
        cls_sum = cls_sum + jnp.sum(w * _bce_logits(xf, zf))
    return obj_sum, cls_sum


# -----------------------------------------------------------------------------
# PreprocessTargets (label preprocessing) — plain JAX glue
# -----------------------------------------------------------------------------
def make_anchors(anchors_px, strides):
    """Replicates: tensor.view(2, A).transpose(1, 0) / stride   -> (A, 2)."""
    out = []
    for (ws, hs), s in zip(anchors_px, strides):
        a = jnp.array([ws, hs], dtype=jnp.float32)   # (2, A)
        out.append(a.T / float(s))                   # (A, 2)
    return out


def get_indices_tbox(labels, head_idx, cfg):
    A = cfg["anchor_per_scale"]
    fs = cfg["train_input_sizes"][head_idx]
    anchors = cfg["anchors"][head_idx]               # (A, 2) in grid units
    max_n = cfg["max_n_labels"][head_idx]
    b, n = labels.shape[0], labels.shape[1]
    g = 0.5
    off = jnp.array([[0.0, 0.0], [1.0, 0.0], [0.0, 1.0],
                     [-1.0, 0.0], [0.0, -1.0]], dtype=jnp.float32) * g

    classes = labels[:, :, 0:1]
    xywh = labels[:, :, 1:] * fs
    lab = jnp.concatenate([classes, xywh], axis=-1)                       # (b,n,5)
    lab = jnp.broadcast_to(lab[:, :, None, :], (b, n, A, 5))
    anchor_col = jnp.broadcast_to(
        jnp.arange(1.0, A + 1.0, dtype=jnp.float32).reshape(1, 1, A, 1),
        (b, n, A, 1))
    lab = jnp.concatenate([lab, anchor_col], axis=-1)                     # (b,n,A,6)

    labels_wh = lab[:, :, :, 3:5]
    ratio = labels_wh / anchors[None, None, :, :]
    worse = jnp.maximum(ratio, 1.0 / ratio)
    # NOTE: the reference applies batch-0's anchor mask to all batch items
    # (torch.amax(...)[0]); kept verbatim for faithfulness.
    m = jnp.max(worse, axis=3)[0]                    # (n, A)
    m = jnp.where(m != 0.0, m, jnp.float32(65504.0))  # finfo(half).max
    m = m < cfg["anchor_threshold"]                  # bool (n, A)

    best_targets = jnp.where(m[None, :, :, None], lab, 0.0)              # (b,n,A,6)
    best_xy = best_targets[:, :, :, 1:3]
    best_inv_xy = jnp.where(best_xy != 0.0, fs - best_xy, 0.0)

    xy_m = (best_xy % 1.0 < g) & (best_xy > 1.0)
    inv_m = (best_inv_xy % 1.0 < g) & (best_inv_xy > 1.0)
    x_mask, y_mask = xy_m[..., 0], xy_m[..., 1]
    ix_mask, iy_mask = inv_m[..., 0], inv_m[..., 1]
    indices = jnp.stack([jnp.ones_like(x_mask), x_mask, y_mask,
                         ix_mask, iy_mask])                                # (5,b,n,A)

    targets = jnp.where(indices[..., None], best_targets[None], 0.0)      # (5,b,n,A,6)
    offsets = jnp.where(
        indices[..., None],
        jnp.broadcast_to(off.reshape(5, 1, 1, 1, 2), (5, b, n, A, 2)),
        0.0)
    targets = targets.reshape(-1, 6)
    offsets = offsets.reshape(-1, 2)

    cxywh_added = jnp.sum(targets, axis=-1)
    _, idx_filter = jax.lax.top_k(cxywh_added, max_n)
    targets = targets[idx_filter]
    offsets = offsets[idx_filter]

    cls = targets[:, 0:1]
    label_xy = targets[:, 1:3]
    label_wh = targets[:, 3:5]
    label_xy_indices = jnp.where(label_xy != 0.0,
                                 (label_xy - offsets).astype(jnp.int32), 0)
    # The reference clamps in place, so the clamped values also feed t_boxes.
    label_xy_indices = jnp.clip(label_xy_indices, 0, fs - 1)
    x_ind = label_xy_indices[:, 0]
    y_ind = label_xy_indices[:, 1]
    anchor_ind_out = jnp.clip(targets[:, 5] - 1.0, 0.0,
                              min(4.0, A - 1.0)).astype(jnp.int32)
    t_boxes = jnp.concatenate(
        [cls, label_xy - label_xy_indices.astype(jnp.float32), label_wh], axis=-1)
    return anchor_ind_out, y_ind, x_ind, t_boxes


# -----------------------------------------------------------------------------
# CIoU (bbox_iou with special_iou_type='ciou', is_xyxy=False)
# TODO(synk): reference bbox_iou source not provided; standard YOLOv4/v5 CIoU
# used here; kept in plain JAX (tiny per-target workload, uses arctan).
# -----------------------------------------------------------------------------
def bbox_ciou(box1, box2, eps=1e-9):
    b1_x1, b1_y1 = box1[:, 0] - box1[:, 2] / 2, box1[:, 1] - box1[:, 3] / 2
    b1_x2, b1_y2 = box1[:, 0] + box1[:, 2] / 2, box1[:, 1] + box1[:, 3] / 2
    b2_x1, b2_y1 = box2[:, 0] - box2[:, 2] / 2, box2[:, 1] - box2[:, 3] / 2
    b2_x2, b2_y2 = box2[:, 0] + box2[:, 2] / 2, box2[:, 1] + box2[:, 3] / 2
    inter = (jnp.clip(jnp.minimum(b1_x2, b2_x2) - jnp.maximum(b1_x1, b2_x1), 0.0, None) *
             jnp.clip(jnp.minimum(b1_y2, b2_y2) - jnp.maximum(b1_y1, b2_y1), 0.0, None))
    w1, h1 = b1_x2 - b1_x1, b1_y2 - b1_y1
    w2, h2 = b2_x2 - b2_x1, b2_y2 - b2_y1
    union = w1 * h1 + w2 * h2 - inter + eps
    iou = inter / union
    cw = jnp.maximum(b1_x2, b2_x2) - jnp.minimum(b1_x1, b2_x1)
    ch = jnp.maximum(b1_y2, b2_y2) - jnp.minimum(b1_y1, b2_y1)
    c2 = cw ** 2 + ch ** 2 + eps
    rho2 = ((b2_x1 + b2_x2 - b1_x1 - b1_x2) ** 2 +
            (b2_y1 + b2_y2 - b1_y1 - b1_y2) ** 2) / 4.0
    v = (4.0 / math.pi ** 2) * (jnp.arctan(w2 / (h2 + eps)) -
                                jnp.arctan(w1 / (h1 + eps))) ** 2
    alpha = v / (v - iou + (1.0 + eps))
    return iou - (rho2 / c2 + v * alpha)


# -----------------------------------------------------------------------------
# Shared per-head glue (gathers, CIoU, masks, dedup of the objectness scatter)
# -----------------------------------------------------------------------------
def _per_head_terms(pred, labels, head_idx, cfg):
    eps32 = float(jnp.finfo(jnp.float32).eps)
    nc = cfg["n_classes"]
    anchor_ind, y_ind, x_ind, t_boxes = get_indices_tbox(labels, head_idx, cfg)
    t_boxes = t_boxes.astype(jnp.float32)
    mask = jnp.where(t_boxes[:, 0] == 0.0, 0.0, 1.0)
    mask_sum = jnp.sum(mask)
    valid = mask > 0.0
    B, A, H, W, C = pred.shape
    flat_pred = pred.reshape(-1, C).astype(jnp.float32)
    n = flat_pred.shape[0]
    # Mirrors reference flatten_indices exactly (no batch offset).
    indices = anchor_ind * (H * W) + y_ind * W + x_ind
    fp = flat_pred[indices]                                   # (M, C) gathered
    anchors = cfg["anchors"][head_idx]
    p = jax.nn.sigmoid(fp[:, :4]) * 2.0
    pbox = jnp.concatenate(
        [p[:, :2] - 0.5, p[:, 2:4] * p[:, 2:4] * anchors[anchor_ind]], axis=-1)
    tbox = t_boxes[:, 1:]
    ciou = bbox_ciou(pbox, tbox)

    # ---- box loss term (tiny per-target workload, plain JAX)
    ciou_sum = jnp.zeros((2,), jnp.float32).at[mask.astype(jnp.int32)].add(ciou)
    mean = ciou_sum[1] / (mask_sum + eps32)
    box_term = jnp.where(mask_sum > 0, 1.0 - mean, 0.0)

    # ---- objectness targets + scatter dedup (last write wins, matching the
    #      reference's index-assignment scatter semantics)
    objectness = (1.0 - cfg["ciou_ratio"] +
                  cfg["ciou_ratio"] * jnp.maximum(ciou, 0.0))
    M = indices.shape[0]
    ii = jnp.arange(M)
    dup_later = jnp.any((indices[None, :] == indices[:, None]) &
                        valid[None, :] & (ii[None, :] > ii[:, None]), axis=1)
    effective = valid & ~dup_later

    # ---- class pieces
    cls_idx = jnp.clip(t_boxes[:, 0].astype(jnp.int32) - 1, 0, nc - 1)
    pred_c = fp[:, 5:5 + nc]
    true_c = jnp.full((M, nc), cfg["cn"], jnp.float32)
    true_c = true_c.at[jnp.arange(M), cls_idx].set(cfg["cp"])
    cls_w = jnp.where(mask_sum > 0, 1.0 / (mask_sum * nc + eps32), 0.0)

    return dict(mask=mask, mask_sum=mask_sum, valid=valid, effective=effective,
                indices=indices, flat_pred=flat_pred, fp=fp, n=n,
                objectness=objectness, box_term=box_term,
                pred_c=pred_c, true_c=true_c, cls_w=cls_w,
                balance_over_n=cfg["balance"][head_idx] / float(n))


def build_loss_terms(predictions, real_labels, cfg):
    """Returns dict with the Pallas-kernel segments + the tiny JAX-side terms."""
    box_raw = jnp.zeros((1,), jnp.float32)
    obj_segments, cls_segments = [], []
    obj_correction = jnp.float32(0.0)

    for head_idx, pred in enumerate(predictions):
        t = _per_head_terms(pred, real_labels, head_idx, cfg)
        box_raw = box_raw + t["box_term"]

        # ---- dense objectness logits, streamed as bf16 (target is sparse)
        C = pred.shape[-1]
        # TODO(synk): flat_pred[:, 4] is a strided channel extraction that XLA
        # must materialize once per head; avoiding it would require an
        # obj-contiguous prediction layout upstream.
        pred_obj_bf16 = pred.reshape(-1, C)[:, 4].astype(jnp.bfloat16)
        obj_segments.append((pred_obj_bf16, t["balance_over_n"]))

        # sparse correction: BCE(x, z) = BCE(x, 0) - x*z, nonzero z only on the
        # deduplicated, valid scattered rows -> add it on gathered rows in JAX.
        corr = jnp.sum(jnp.where(t["effective"],
                                 t["fp"][:, 4] * t["objectness"], 0.0))
        obj_correction = obj_correction + t["balance_over_n"] * corr

        # ---- class stream (tiny): masked logits/targets + per-element weight
        valid_col = t["valid"][:, None]
        x_cls = jnp.where(valid_col, t["pred_c"], _NEUTRAL_LOGIT).astype(jnp.bfloat16)
        z_cls = jnp.where(valid_col, t["true_c"], 0.0).astype(jnp.bfloat16)
        w_cls = jnp.broadcast_to(
            jnp.where(valid_col, t["cls_w"], 0.0).astype(jnp.float32),
            t["pred_c"].shape)
        cls_segments.append((x_cls.reshape(-1), z_cls.reshape(-1),
                             w_cls.reshape(-1)))

    return dict(box_raw=box_raw, obj_segments=obj_segments,
                obj_correction=obj_correction, cls_segments=cls_segments)


def _finalize(box_raw, obj_raw, cls_raw, cfg):
    box_loss = jnp.reshape(box_raw, (1,)) * cfg["box_gain"]
    obj_loss = (jnp.reshape(obj_raw, (1,)) *
                cfg["object_gain"] * cfg["object_scaling"])
    cls_loss = jnp.reshape(cls_raw, (1,)) * cfg["class_gain"]
    loss = box_loss + obj_loss + cls_loss
    # poptorch.identity_loss is identity on the forward pass.
    return loss, box_loss, obj_loss, cls_loss


def yolov4_loss(predictions, real_labels, cfg, use_pallas=True):
    terms = build_loss_terms(predictions, real_labels, cfg)
    if use_pallas:
        obj_dense, cls_sum = fused_obj_cls_bce(terms["obj_segments"],
                                               terms["cls_segments"])
    else:
        obj_dense, cls_sum = obj_cls_bce_reference(terms["obj_segments"],
                                                   terms["cls_segments"])
    obj_sum = obj_dense - terms["obj_correction"]
    return _finalize(terms["box_raw"], obj_sum, cls_sum, cfg)


def yolov4_loss_dense_reference(predictions, real_labels, cfg):
    """Faithful plain-JAX f32 mirror of the PyTorch module (dense BCE targets;
    duplicate scatter indices resolved as last-write-wins)."""
    nc = cfg["n_classes"]
    eps32 = float(jnp.finfo(jnp.float32).eps)
    box = jnp.zeros((1,), jnp.float32)
    obj = jnp.zeros((1,), jnp.float32)
    cls = jnp.zeros((1,), jnp.float32)
    for head_idx, pred in enumerate(predictions):
        t = _per_head_terms(pred, real_labels, head_idx, cfg)
        box = box + t["box_term"]
        pred_obj = t["flat_pred"][:, 4]
        z = jnp.zeros((t["n"],), jnp.float32).at[t["indices"]].add(
            jnp.where(t["effective"], t["objectness"], 0.0))
        obj = obj + jnp.mean(_bce_logits(pred_obj, z)) * cfg["balance"][head_idx]
        bce_c = _bce_logits(t["pred_c"], t["true_c"])
        cls_h = jnp.sum(jnp.where(t["valid"][:, None], bce_c, 0.0))
        cls = cls + jnp.where(t["mask_sum"] > 0,
                              cls_h / (t["mask_sum"] * nc + eps32), 0.0)
    return _finalize(box, obj, cls, cfg)


# -----------------------------------------------------------------------------
# Driver
# -----------------------------------------------------------------------------
if __name__ == "__main__":
    key = jax.random.PRNGKey(0)
    B, n_labels = 2, 8
    image_size = 128
    strides = [8, 16, 32]
    n_classes = 4
    A = 3
    train_input_sizes = [image_size // s for s in strides]
    anchors_px = [
        ([8.0, 16.0, 24.0], [10.0, 20.0, 30.0]),
        ([16.0, 32.0, 48.0], [20.0, 40.0, 56.0]),
        ([32.0, 64.0, 96.0], [40.0, 72.0, 112.0]),
    ]

    cfg = dict(
        anchor_per_scale=A,
        train_input_sizes=train_input_sizes,
        anchors=make_anchors(anchors_px, strides),
        anchor_threshold=4.0,
        max_n_labels=[48, 32, 16],
        n_classes=n_classes,
        ciou_ratio=1.0,
        balance=[4.0, 1.0, 0.4],          # 3 prediction heads
        box_gain=0.05,
        object_gain=1.0,
        class_gain=0.5,
        object_scaling=1.0,               # < 4 heads
        cp=1.0, cn=0.0,                   # smooth_BCE(eps=0.0)
    )

    k1, k2, k3, k4 = jax.random.split(key, 4)
    cls_lab = jax.random.randint(k1, (B, n_labels, 1), 1,
                                 n_classes + 1).astype(jnp.float32)
    xy = jax.random.uniform(k2, (B, n_labels, 2), minval=0.1, maxval=0.9)
    wh = jax.random.uniform(k3, (B, n_labels, 2), minval=0.05, maxval=0.3)
    labels = jnp.concatenate([cls_lab, xy, wh], axis=-1)
    # last 2 labels of each image are padding (class 0, all-zero row)
    pad_keep = (jnp.arange(n_labels) < n_labels - 2).astype(jnp.float32)[None, :, None]
    labels = labels * pad_keep

    pred_keys = jax.random.split(k4, 3)
    predictions = [
        0.1 * jax.random.normal(pred_keys[i],
                                (B, A, fs, fs, 5 + n_classes), dtype=jnp.float32)
        for i, fs in enumerate(train_input_sizes)
    ]

    run_pallas = jax.jit(lambda p, l: yolov4_loss(p, l, cfg, use_pallas=True))
    run_mirror = jax.jit(lambda p, l: yolov4_loss(p, l, cfg, use_pallas=False))
    run_dense = jax.jit(lambda p, l: yolov4_loss_dense_reference(p, l, cfg))

    out = jax.block_until_ready(run_pallas(predictions, labels))
    ref_mirror = jax.block_until_ready(run_mirror(predictions, labels))
    ref_dense = jax.block_until_ready(run_dense(predictions, labels))

    for a in out:
        assert bool(jnp.isfinite(a).all())
    # Pallas hot path must match the plain-JAX mirror of the same math.
    for a, b in zip(out, ref_mirror):
        assert bool(jnp.allclose(a, b, rtol=1e-4, atol=1e-6)), (a, b)
    # And stay close to the full-precision dense (reference-faithful) loss;
    # the only difference is bf16 streaming of the BCE logits.
    for a, b in zip(out, ref_dense):
        assert bool(jnp.allclose(a, b, rtol=1e-2, atol=1e-4)), (a, b)
    print("KERNEL_OK")
</pallas_src>

<mosaic_0001>
module attributes {stable_mosaic.version = 11 : i64} {
  func.func @kernel(%arg0: i32, %arg1: memref<16x128xbf16, #tpu.memory_space<vmem>>, %arg2: memref<16x128xbf16, #tpu.memory_space<vmem>>, %arg3: memref<16x128xbf16, #tpu.memory_space<vmem>>, %arg4: memref<16x128xf32, #tpu.memory_space<vmem>>, %arg5: memref<1x2x8x128xf32, #tpu.memory_space<vmem>>) attributes {dimension_semantics = [#tpu.dimension_semantics<parallel>], iteration_bounds = array<i64: 1>, scalar_prefetch = 0 : i64, scratch_operands = 0 : i64, tpu.core_type = #tpu.core_type<tc>, window_params = [{transform_indices = @transform_0, window_bounds = array<i64: 16, 128>}, {pipeline_mode = #tpu.pipeline_mode<synchronous>, transform_indices = @transform_1, window_bounds = array<i64: 16, 128>}, {pipeline_mode = #tpu.pipeline_mode<synchronous>, transform_indices = @transform_2, window_bounds = array<i64: 16, 128>}, {pipeline_mode = #tpu.pipeline_mode<synchronous>, transform_indices = @transform_3, window_bounds = array<i64: 16, 128>}, {transform_indices = @transform_4, window_bounds = array<i64: 1, 2, 8, 128>}]} {
    %c0 = arith.constant 0 : index
    %c0_0 = arith.constant 0 : index
    %0 = vector.load %arg1[%c0, %c0_0] : memref<16x128xbf16, #tpu.memory_space<vmem>>, vector<16x128xbf16>
    %1 = arith.extf %0 : vector<16x128xbf16> to vector<16x128xf32>
    %cst = arith.constant 0.000000e+00 : f32
    %2 = vector.broadcast %cst : f32 to vector<16x128xf32>
    %3 = arith.maximumf %1, %2 : vector<16x128xf32>
    %4 = math.absf %1 : vector<16x128xf32>
    %cst_1 = arith.constant 0.000000e+00 : f32
    %5 = vector.broadcast %cst_1 : f32 to vector<16x128xf32>
    %6 = arith.subf %5, %4 : vector<16x128xf32>
    %7 = math.exp %6 : vector<16x128xf32>
    %cst_2 = arith.constant 1.000000e+00 : f32
    %8 = vector.broadcast %cst_2 : f32 to vector<16x128xf32>
    %9 = arith.addf %8, %7 : vector<16x128xf32>
    %10 = math.log %9 : vector<16x128xf32>
    %11 = arith.addf %3, %10 : vector<16x128xf32>
    %c16_i32 = arith.constant 16 : i32
    %12 = arith.muli %arg0, %c16_i32 : i32
    %13 = tpu.iota {dimensions = array<i32: 0>} : vector<16x1xi32>
    %14 = vector.broadcast %12 : i32 to vector<16x1xi32>
    %15 = arith.addi %14, %13 : vector<16x1xi32>
    %cst_3 = arith.constant 0.000000e+00 : f32
    %16 = vector.broadcast %cst_3 : f32 to vector<16x1xf32>
    %c0_i32 = arith.constant 0 : i32
    %17 = vector.broadcast %c0_i32 : i32 to vector<16x1xi32>
    %18 = arith.cmpi sge, %15, %17 : vector<16x1xi32>
    %c12_i32 = arith.constant 12 : i32
    %19 = vector.broadcast %c12_i32 : i32 to vector<16x1xi32>
    %20 = arith.cmpi slt, %15, %19 : vector<16x1xi32>
    %21 = arith.andi %18, %20 : vector<16x1xi1>
    %cst_4 = arith.constant 0.00260416674 : f32
    %22 = vector.broadcast %cst_4 : f32 to vector<16x1xf32>
    %23 = arith.select %21, %22, %16 : vector<16x1xi1>, vector<16x1xf32>
    %c12_i32_5 = arith.constant 12 : i32
    %24 = vector.broadcast %c12_i32_5 : i32 to vector<16x1xi32>
    %25 = arith.cmpi sge, %15, %24 : vector<16x1xi32>
    %c15_i32 = arith.constant 15 : i32
    %26 = vector.broadcast %c15_i32 : i32 to vector<16x1xi32>
    %27 = arith.cmpi slt, %15, %26 : vector<16x1xi32>
    %28 = arith.andi %25, %27 : vector<16x1xi1>
    %cst_6 = arith.constant 0.00260416674 : f32
    %29 = vector.broadcast %cst_6 : f32 to vector<16x1xf32>
    %30 = arith.select %28, %29, %23 : vector<16x1xi1>, vector<16x1xf32>
    %c15_i32_7 = arith.constant 15 : i32
    %31 = vector.broadcast %c15_i32_7 : i32 to vector<16x1xi32>
    %32 = arith.cmpi sge, %15, %31 : vector<16x1xi32>
    %c16_i32_8 = arith.constant 16 : i32
    %33 = vector.broadcast %c16_i32_8 : i32 to vector<16x1xi32>
    %34 = arith.cmpi slt, %15, %33 : vector<16x1xi32>
    %35 = arith.andi %32, %34 : vector<16x1xi1>
    %cst_9 = arith.constant 0.00416666688 : f32
    %36 = vector.broadcast %cst_9 : f32 to vector<16x1xf32>
    %37 = arith.select %35, %36, %30 : vector<16x1xi1>, vector<16x1xf32>
    %38 = vector.broadcast %37 : vector<16x1xf32> to vector<16x128xf32>
    %39 = arith.mulf %38, %11 : vector<16x128xf32>
    %40 = vector.shape_cast %39 : vector<16x128xf32> to vector<2x8x128xf32>
    %cst_10 = arith.constant dense<0.000000e+00> : vector<8x128xf32>
    %41 = vector.multi_reduction <add>, %40, %cst_10 [0] : vector<2x8x128xf32> to vector<8x128xf32>
    %c0_11 = arith.constant 0 : index
    %c0_12 = arith.constant 0 : index
    %42 = vector.load %arg2[%c0_11, %c0_12] : memref<16x128xbf16, #tpu.memory_space<vmem>>, vector<16x128xbf16>
    %43 = arith.extf %42 : vector<16x128xbf16> to vector<16x128xf32>
    %c0_13 = arith.constant 0 : index
    %c0_14 = arith.constant 0 : index
    %44 = vector.load %arg3[%c0_13, %c0_14] : memref<16x128xbf16, #tpu.memory_space<vmem>>, vector<16x128xbf16>
    %45 = arith.extf %44 : vector<16x128xbf16> to vector<16x128xf32>
    %c0_15 = arith.constant 0 : index
    %c0_16 = arith.constant 0 : index
    %46 = vector.load %arg4[%c0_15, %c0_16] : memref<16x128xf32, #tpu.memory_space<vmem>>, vector<16x128xf32>
    %cst_17 = arith.constant 0.000000e+00 : f32
    %47 = vector.broadcast %cst_17 : f32 to vector<16x128xf32>
    %48 = arith.maximumf %43, %47 : vector<16x128xf32>
    %49 = arith.mulf %43, %45 : vector<16x128xf32>
    %50 = arith.subf %48, %49 : vector<16x128xf32>
    %51 = math.absf %43 : vector<16x128xf32>
    %cst_18 = arith.constant 0.000000e+00 : f32
    %52 = vector.broadcast %cst_18 : f32 to vector<16x128xf32>
    %53 = arith.subf %52, %51 : vector<16x128xf32>
    %54 = math.exp %53 : vector<16x128xf32>
    %cst_19 = arith.constant 1.000000e+00 : f32
    %55 = vector.broadcast %cst_19 : f32 to vector<16x128xf32>
    %56 = arith.addf %55, %54 : vector<16x128xf32>
    %57 = math.log %56 : vector<16x128xf32>
    %58 = arith.addf %50, %57 : vector<16x128xf32>
    %59 = arith.mulf %46, %58 : vector<16x128xf32>
    %60 = vector.shape_cast %59 : vector<16x128xf32> to vector<2x8x128xf32>
    %cst_20 = arith.constant dense<0.000000e+00> : vector<8x128xf32>
    %61 = vector.multi_reduction <add>, %60, %cst_20 [0] : vector<2x8x128xf32> to vector<8x128xf32>
    %c0_i32_21 = arith.constant 0 : i32
    %62 = arith.cmpi eq, %arg0, %c0_i32_21 : i32
    %63 = arith.extui %62 : i1 to i32
    %64 = arith.sitofp %63 : i32 to f32
    %65 = vector.broadcast %64 : f32 to vector<8x128xf32>
    %66 = arith.mulf %61, %65 : vector<8x128xf32>
    %c0_22 = arith.constant 0 : index
    %c0_23 = arith.constant 0 : index
    %c0_24 = arith.constant 0 : index
    %c0_25 = arith.constant 0 : index
    %67 = vector.load %arg5[%c0_22, %c0_23, %c0_24, %c0_25] : memref<1x2x8x128xf32, #tpu.memory_space<vmem>>, vector<1x1x8x128xf32>
    %68 = vector.shape_cast %67 : vector<1x1x8x128xf32> to vector<8x128xf32>
    %69 = vector.shape_cast %41 : vector<8x128xf32> to vector<1x1x8x128xf32>
    tpu.vector_store %arg5[%c0_22, %c0_23, %c0_24, %c0_25], %69 {strides = array<i32>} : memref<1x2x8x128xf32, #tpu.memory_space<vmem>>, vector<1x1x8x128xf32>,
    %c0_26 = arith.constant 0 : index
    %c1 = arith.constant 1 : index
    %c0_27 = arith.constant 0 : index
    %c0_28 = arith.constant 0 : index
    %70 = vector.load %arg5[%c0_26, %c1, %c0_27, %c0_28] : memref<1x2x8x128xf32, #tpu.memory_space<vmem>>, vector<1x1x8x128xf32>
    %71 = vector.shape_cast %70 : vector<1x1x8x128xf32> to vector<8x128xf32>
    %72 = vector.shape_cast %66 : vector<8x128xf32> to vector<1x1x8x128xf32>
    tpu.vector_store %arg5[%c0_26, %c1, %c0_27, %c0_28], %72 {strides = array<i32>} : memref<1x2x8x128xf32, #tpu.memory_space<vmem>>, vector<1x1x8x128xf32>,
    return
  }
  func.func @transform_0(%arg0: i32) -> (i32, i32) {
    %c0_i32 = arith.constant 0 : i32
    %c0_i32_0 = arith.constant 0 : i32
    return %arg0, %c0_i32 : i32, i32
  }
  func.func @transform_1(%arg0: i32) -> (i32, i32) {
    %c0_i32 = arith.constant 0 : i32
    %c0_i32_0 = arith.constant 0 : i32
    %c0_i32_1 = arith.constant 0 : i32
    return %c0_i32, %c0_i32_0 : i32, i32
  }
  func.func @transform_2(%arg0: i32) -> (i32, i32) {
    %c0_i32 = arith.constant 0 : i32
    %c0_i32_0 = arith.constant 0 : i32
    %c0_i32_1 = arith.constant 0 : i32
    return %c0_i32, %c0_i32_0 : i32, i32
  }
  func.func @transform_3(%arg0: i32) -> (i32, i32) {
    %c0_i32 = arith.constant 0 : i32
    %c0_i32_0 = arith.constant 0 : i32
    %c0_i32_1 = arith.constant 0 : i32
    return %c0_i32, %c0_i32_0 : i32, i32
  }
  func.func @transform_4(%arg0: i32) -> (i32, i32, i32, i32) {
    %c0_i32 = arith.constant 0 : i32
    %c0_i32_0 = arith.constant 0 : i32
    %c0_i32_1 = arith.constant 0 : i32
    %c0_i32_2 = arith.constant 0 : i32
    return %arg0, %c0_i32, %c0_i32_0, %c0_i32_1 : i32, i32, i32, i32
  }
}

</mosaic_0001>

<llo_original>
// kernel: _lambda_.1
$region0: #{_lambda_.1}
  #allocation0 [shape = 'u32[]', space=smem, size = 0x4, offset = 0x4, fixed_abs, tag = 'smem constant byte address 0x4 - core index']
  #allocation1 [shape = 'u32[72,128]{1,0:T(1,128)}', space=vmem, size = 0x9000, scoped, tag = 'internal scratch']
  %s0 = inlined_call_operand.vmem [shape: bf16[16,128], index: 0, kind: input, shape index: {}]
  %s1 = inlined_call_operand.vmem [shape: bf16[16,128], index: 1, kind: input, shape index: {}]
  %s2 = inlined_call_operand.vmem [shape: bf16[16,128], index: 2, kind: input, shape index: {}]
  %s3 = inlined_call_operand.vmem [shape: f32[16,128], index: 3, kind: input, shape index: {}]
  %s4 = inlined_call_operand.vmem [shape: f32[1,2,8,128], index: 4, kind: output, shape index: {}]
  %s5 = sld [smem:[#allocation0]]
  $region26: #{_lambda_.1} parent=0
    _
  %s7 = ssub.s32 1, %s5
  %s8 = scalar_select 0, %s7, %s5
  // Predicated region
  $region2: #{_lambda_.1} parent=0 // pred_check
    _
  $region3: #{_lambda_.1} parent=0 // pred_check_branch
    %10 = sbr.rel (0) target = $region5
  $region4: #{_lambda_.1} parent=0 // pred_region
    _
  $region5: #{_lambda_.1} parent=0 // pred_fallthru
    _
  // Predicated region
  $region6: #{_lambda_.1} parent=0 // pred_check
    _
  $region7: #{_lambda_.1} parent=0 // pred_check_branch
    %12 = sbr.rel (0) target = $region9
  $region8: #{_lambda_.1} parent=0 // pred_region
    _
  $region9: #{_lambda_.1} parent=0 // pred_fallthru
    _
  // Predicated region
  $region10: #{_lambda_.1} parent=0 // pred_check
    _
  $region11: #{_lambda_.1} parent=0 // pred_check_branch
    %14 = sbr.rel (0) target = $region13
  $region12: #{_lambda_.1} parent=0 // pred_region
    _
  $region13: #{_lambda_.1} parent=0 // pred_fallthru
    _
  // Predicated region
  $region14: #{_lambda_.1} parent=0 // pred_check
    _
  $region15: #{_lambda_.1} parent=0 // pred_check_branch
    %16 = sbr.rel (0) target = $region17
  $region16: #{_lambda_.1} parent=0 // pred_region
    _
  $region17: #{_lambda_.1} parent=0 // pred_fallthru
    _
  %v17 = vld [vmem:[%s0] sm:$0xf]
  %v18 = vld [vmem:[%s0 + $0x4] sm:$0xf]
  %v19 = vunpack.c.l.bf16 %v17
  %v20 = vunpack.c.l.bf16 %v18
  %v21 = vmax.f32 %v19, 0.0
  %v22 = vmax.f32 %v20, 0.0
  %v23 = vand.u32 2147483647, %v19
  %v24 = vand.u32 2147483647, %v20
  %v25 = vsub.f32 0.0, %v23
  %v26 = vsub.f32 0.0, %v24
  %v27 = vmul.f32 %v25, 1.442695
  %v28 = vpow.pop %v27
  %v29 = vmul.f32 %v26, 1.442695
  %v30 = vpow.pop %v29
  %v31 = vadd.f32 %v28, 1.0
  %v32 = vadd.f32 %v30, 1.0
  %v33 = vlog2.pop %v31
  %v34 = vmul.f32 %v33, 0.6931472
  %v35 = vlog2.pop %v32
  %v36 = vmul.f32 %v35, 0.6931472
  %v37 = vadd.f32 %v21, %v34
  %v38 = vadd.f32 %v22, %v36
  %s39 = smul.u32 0, 16
  %v40 = vlaneseq
  %v41 = vshrl.u32 %v40, 7
  %v42 = vadd.s32 %v41, 8
  %v43 = vstv %s39
  %v44 = vadd.s32 %v43, %v41
  %v45 = vadd.s32 %v43, %v42
  %vm46 = vcmp.ge.s32.totalorder %v44, 0
  %vm47 = vcmp.ge.s32.totalorder %v45, 0
  %vm48 = vcmp.lt.s32.totalorder %v44, 12
  %vm49 = vcmp.lt.s32.totalorder %v45, 12
  %vm50 = vmand %vm46, %vm48
  %vm51 = vmand %vm47, %vm49
  %v52 = vsel %vm50, 0.0026041667, 0.0
  %v53 = vsel %vm51, 0.0026041667, 0.0
  %vm54 = vcmp.ge.s32.totalorder %v44, 12
  %vm55 = vcmp.ge.s32.totalorder %v45, 12
  %vm56 = vcmp.lt.s32.totalorder %v44, 15
  %vm57 = vcmp.lt.s32.totalorder %v45, 15
  %vm58 = vmand %vm54, %vm56
  %vm59 = vmand %vm55, %vm57
  %v60 = vsel %vm58, 0.0026041667, %v52
  %v61 = vsel %vm59, 0.0026041667, %v53
  %vm62 = vcmp.ge.s32.totalorder %v44, 15
  %vm63 = vcmp.ge.s32.totalorder %v45, 15
  %vm64 = vcmp.lt.s32.totalorder %v44, 16
  %vm65 = vcmp.lt.s32.totalorder %v45, 16
  %vm66 = vmand %vm62, %vm64
  %vm67 = vmand %vm63, %vm65
  %v68 = vsel %vm66, 0.004166667, %v60
  %v69 = vsel %vm67, 0.004166667, %v61
  %v70 = vmul.f32 %v68, %v37
  %v71 = vmul.f32 %v69, %v38
  %v72 = vadd.f32 %v70, %v71
  %v73 = vld [vmem:[%s1] sm:$0xf]
  %v74 = vld [vmem:[%s1 + $0x4] sm:$0xf]
  %v75 = vunpack.c.l.bf16 %v73
  %v76 = vunpack.c.l.bf16 %v74
  %v77 = vld [vmem:[%s2] sm:$0xf]
  %v78 = vld [vmem:[%s2 + $0x4] sm:$0xf]
  %v79 = vunpack.c.l.bf16 %v77
  %v80 = vunpack.c.l.bf16 %v78
  %v81 = vld [vmem:[%s3] sm:$0xff]
  %v82 = vld [vmem:[%s3 + $0x8] sm:$0xff]
  %v83 = vmax.f32 %v75, 0.0
  %v84 = vmax.f32 %v76, 0.0
  %v85 = vmul.f32 %v75, %v79
  %v86 = vmul.f32 %v76, %v80
  %v87 = vsub.f32 %v83, %v85
  %v88 = vsub.f32 %v84, %v86
  %v89 = vand.u32 2147483647, %v75
  %v90 = vand.u32 2147483647, %v76
  %v91 = vsub.f32 0.0, %v89
  %v92 = vsub.f32 0.0, %v90
  %v93 = vmul.f32 %v91, 1.442695
  %v94 = vpow.pop %v93
  %v95 = vmul.f32 %v92, 1.442695
  %v96 = vpow.pop %v95
  %v97 = vadd.f32 %v94, 1.0
  %v98 = vadd.f32 %v96, 1.0
  %v99 = vlog2.pop %v97
  %v100 = vmul.f32 %v99, 0.6931472
  %v101 = vlog2.pop %v98
  %v102 = vmul.f32 %v101, 0.6931472
  %v103 = vadd.f32 %v87, %v100
  %v104 = vadd.f32 %v88, %v102
  %v105 = vmul.f32 %v81, %v103
  %v106 = vmul.f32 %v82, %v104
  %v107 = vadd.f32 %v105, %v106
  %p108 = scmp.eq.s32.totalorder 0, 0
  %s109 = scalar_select %p108, 1, 0
  %s110 = scvt.s32.f32 %s109
  %v111 = vstv %s110
  %v112 = vmul.f32 %v107, %v111
  %113 = vst [vmem:[%s4] sm:$0xff] %v72
  %s114 = scalar_lea.vmem %s4, 8
  %115 = vst [vmem:[%s114] sm:$0xff] %v112
  // Predicated region
  $region18: #{_lambda_.1} parent=0 // pred_check
    _
  $region19: #{_lambda_.1} parent=0 // pred_check_branch
    %117 = sbr.rel (0) target = $region21
  $region20: #{_lambda_.1} parent=0 // pred_region
    _
  $region21: #{_lambda_.1} parent=0 // pred_fallthru
    _
  // Predicated region
  $region22: #{_lambda_.1} parent=0 // pred_check
    _
  $region23: #{_lambda_.1} parent=0 // pred_check_branch
    %119 = sbr.rel (0) target = $region25
  $region24: #{_lambda_.1} parent=0 // pred_region
    _
  $region25: #{_lambda_.1} parent=0 // pred_fallthru
    _

</llo_original>
